<compile_context>
chip_gen: v5e
topology: v5e:2x2
jax: 0.10.0
libtpu: 0.0.40
codegen_flags: <defaults>
</compile_context>

<pallas_src>
import functools

import jax
import jax.numpy as jnp
from jax.experimental import pallas as pl
from jax.experimental.pallas import tpu as pltpu

# ----------------------------- configuration -----------------------------
B = 2            # batch
NUM_LEADS = 4    # (module default 12, shrunk for the demo)
SEQ_LEN = 64     # (module default 2250, shrunk for the demo)
PATCH = 16       # patch size for the stand-in encoder
WIDTH = 32       # encoder.width (encoder_dim)
LATENT = 32      # latent_dim
NUM_EMB = 64     # num_embeddings (codebook size)
COMMIT = 0.25    # commitment_cost

ROWS = 8         # sublane-padded row count (>= B, multiple of 8)


# ------------------------------ fused Pallas kernel ------------------------
def _fused_vqvae_kernel(x_ref, w_enc_ref, b_enc_ref, w_lat_ref, b_lat_ref,
                        cb_ref, e2h_ref, w_d1_ref, b_d1_ref, w_d2_ref, b_d2_ref,
                        recon_ref, idx_ref, vq_loss_ref, recon_loss_ref,
                        *, valid_rows, commitment_cost, x_size, z_size):
    f32 = jnp.float32
    bf16 = jnp.bfloat16

    x = x_ref[...]                                                     # (R, F) f32

    # --- frozen encoder stand-in (mean-patch pooling folded into w_enc) ---
    # bf16 weight stream, f32 accumulation on the MXU.
    feats = jnp.dot(x.astype(bf16), w_enc_ref[...],
                    preferred_element_type=f32) + b_enc_ref[...]       # (R, W)

    # --- to_latent ---
    z = jnp.dot(feats, w_lat_ref[...],
                preferred_element_type=f32) + b_lat_ref[...]           # (R, D)

    # --- vector quantizer: argmin_k ||z - e_k||^2 ---------------------------
    # ||z||^2 is a per-row constant and the whole expression is halved; both
    # leave the argmin ordering unchanged: d = 0.5*||e_k||^2 - <z, e_k>.
    # NOTE: d is NOT a true distance (can be negative); only used for argmin.
    cb = cb_ref[...]                                                   # (K, D) f32
    cross = jax.lax.dot_general(z, cb, (((1,), (1,)), ((), ())),
                                preferred_element_type=f32)            # (R, K)
    d = e2h_ref[...] - cross                                           # (R, K)

    num_k = d.shape[1]
    dmin = jnp.min(d, axis=1, keepdims=True)                           # (R, 1)
    kiota = jax.lax.broadcasted_iota(jnp.int32, d.shape, 1)            # (R, K)
    idx = jnp.min(jnp.where(d <= dmin, kiota, num_k),
                  axis=1, keepdims=True)                               # (R, 1) smallest argmin

    onehot = (kiota == idx).astype(f32)                                # (R, K)
    z_q = jnp.dot(onehot, cb, preferred_element_type=f32)              # (R, D)

    # --- SMEM index output: one scalar store per (padded) row ---
    idx_f = idx.astype(f32)                                            # exact: idx < NUM_EMB
    riota = jax.lax.broadcasted_iota(jnp.int32, idx.shape, 0)          # (R, 1)
    for r in range(idx.shape[0]):
        idx_ref[0, r] = jnp.sum(
            jnp.where(riota == r, idx_f, 0.0)).astype(jnp.int32)

    # --- row-validity mask (R, 1); lane-broadcast into the loss terms ---
    row_mask = (jax.lax.broadcasted_iota(jnp.int32, (idx.shape[0], 1), 0)
                < valid_rows).astype(f32)                              # (R, 1)

    # vq_loss forward value: q_latent + beta * e_latent == (1+beta)*mse(z_q, z)
    dq = (z_q - z) * row_mask
    vq_loss_ref[0, 0] = (1.0 + commitment_cost) * jnp.sum(dq * dq) / z_size

    # --- decoder MLP: Linear -> ReLU -> Linear ---
    h = jnp.maximum(
        jnp.dot(z_q, w_d1_ref[...], preferred_element_type=f32) + b_d1_ref[...],
        0.0)                                                           # (R, W)
    recon = jnp.dot(h.astype(bf16), w_d2_ref[...],
                    preferred_element_type=f32) + b_d2_ref[...]        # (R, F)
    recon_ref[...] = recon.astype(recon_ref.dtype)

    # reconstruction MSE (masked to the real batch rows)
    dr = (recon - x) * row_mask
    recon_loss_ref[0, 0] = jnp.sum(dr * dr) / x_size


# ------------------------------- forward pass -----------------------------
def encoder_vqvae_forward(x, params):
    """Mirrors EncoderVQVAE.forward: returns (x_recon, total_loss, vq_loss, indices)."""
    b, leads, seq = x.shape
    feat = leads * seq

    x_flat = x.reshape(b, feat).astype(jnp.float32)
    x_pad = jnp.pad(x_flat, ((0, ROWS - b), (0, 0)))                   # (ROWS, F)

    kernel = functools.partial(
        _fused_vqvae_kernel,
        valid_rows=b,
        commitment_cost=COMMIT,
        x_size=float(b * feat),
        z_size=float(b * LATENT),
    )

    recon_pad, idx_out, vq_loss, recon_loss = pl.pallas_call(
        kernel,
        out_shape=(jax.ShapeDtypeStruct((ROWS, feat), jnp.float32),    # recon (lane-dense)
                   jax.ShapeDtypeStruct((1, ROWS), jnp.int32),         # indices (SMEM)
                   jax.ShapeDtypeStruct((1, 1), jnp.float32),          # vq_loss
                   jax.ShapeDtypeStruct((1, 1), jnp.float32)),         # recon_loss
        in_specs=[pl.BlockSpec(memory_space=pltpu.MemorySpace.VMEM)] * 11,
        out_specs=(pl.BlockSpec(memory_space=pltpu.MemorySpace.VMEM),
                   pl.BlockSpec(memory_space=pltpu.MemorySpace.SMEM),
                   pl.BlockSpec(memory_space=pltpu.MemorySpace.SMEM),
                   pl.BlockSpec(memory_space=pltpu.MemorySpace.SMEM)),
    )(x_pad,
      params['w_enc'], params['b_enc'],
      params['w_lat'], params['b_lat'],
      params['codebook'], params['e2_half'],
      params['w_d1'], params['b_d1'],
      params['w_d2'], params['b_d2'])

    x_recon = recon_pad[:b].reshape(b, leads, seq)
    indices = idx_out[0, :b]
    vq_loss = vq_loss[0, 0]
    recon_loss = recon_loss[0, 0]
    total_loss = recon_loss + vq_loss
    return x_recon, total_loss, vq_loss, indices


# ---------------------------------- params ---------------------------------
def init_params(key):
    ks = jax.random.split(key, 5)
    scale = 0.02
    feat = NUM_LEADS * SEQ_LEN
    num_patches = feat // PATCH

    # mean-over-patches pooling matrix: pool[t*P + p, p] = 1/T
    pool = jnp.tile(jnp.eye(PATCH, dtype=jnp.float32), (num_patches, 1)) / num_patches
    w_patch = scale * jax.random.normal(ks[0], (PATCH, WIDTH), jnp.float32)
    codebook = scale * jax.random.normal(ks[2], (NUM_EMB, LATENT), jnp.float32)
    w_enc_f32 = pool @ w_patch                                         # (F, WIDTH)
    w_d2_f32 = scale * jax.random.normal(ks[4], (WIDTH, feat), jnp.float32)

    return {
        # frozen encoder stand-in: pooling folded into the patch embedding,
        # stored bf16 (feat-sized weight stream); biases stay f32.
        'w_enc': w_enc_f32.astype(jnp.bfloat16),                       # (F, WIDTH) bf16
        'b_enc': jnp.zeros((1, WIDTH), jnp.float32),
        'w_lat': scale * jax.random.normal(ks[1], (WIDTH, LATENT), jnp.float32),
        'b_lat': jnp.zeros((1, LATENT), jnp.float32),
        'codebook': codebook,                                          # (K, D) f32, single copy
        # precomputed 0.5*||e_k||^2 bias for the argmin (folds the -2 factor)
        'e2_half': 0.5 * jnp.sum(codebook * codebook, axis=1,
                                 keepdims=True).T,                     # (1, K)
        'w_d1': scale * jax.random.normal(ks[3], (LATENT, WIDTH), jnp.float32),
        'b_d1': jnp.zeros((1, WIDTH), jnp.float32),
        'w_d2': w_d2_f32.astype(jnp.bfloat16),                         # (WIDTH, F) bf16
        'b_d2': jnp.zeros((1, feat), jnp.float32),
    }


# ---------------------------------- main ----------------------------------
if __name__ == "__main__":
    key = jax.random.PRNGKey(0)
    k_x, k_p = jax.random.split(key)
    x = jax.random.normal(k_x, (B, NUM_LEADS, SEQ_LEN), jnp.float32)
    params = init_params(k_p)

    fwd = jax.jit(encoder_vqvae_forward)
    x_recon, total_loss, vq_loss, indices = fwd(x, params)
    jax.block_until_ready((x_recon, total_loss, vq_loss, indices))

    assert x_recon.shape == (B, NUM_LEADS, SEQ_LEN)
    assert indices.shape == (B,)
    assert indices.dtype == jnp.int32
    assert total_loss.shape == () and vq_loss.shape == ()
    assert bool(jnp.all(indices >= 0)) and bool(jnp.all(indices < NUM_EMB))
    assert bool(jnp.isfinite(total_loss)) and bool(jnp.isfinite(vq_loss))
    print("KERNEL_OK")
</pallas_src>

<mosaic_0001>
module attributes {stable_mosaic.version = 11 : i64} {
  func.func @_fused_vqvae_kernel(%arg0: memref<8x256xf32, #tpu.memory_space<vmem>>, %arg1: memref<256x32xbf16, #tpu.memory_space<vmem>>, %arg2: memref<1x32xf32, #tpu.memory_space<vmem>>, %arg3: memref<32x32xf32, #tpu.memory_space<vmem>>, %arg4: memref<1x32xf32, #tpu.memory_space<vmem>>, %arg5: memref<64x32xf32, #tpu.memory_space<vmem>>, %arg6: memref<1x64xf32, #tpu.memory_space<vmem>>, %arg7: memref<32x32xf32, #tpu.memory_space<vmem>>, %arg8: memref<1x32xf32, #tpu.memory_space<vmem>>, %arg9: memref<32x256xbf16, #tpu.memory_space<vmem>>, %arg10: memref<1x256xf32, #tpu.memory_space<vmem>>, %arg11: memref<8x256xf32, #tpu.memory_space<vmem>>, %arg12: memref<1x8xi32, #tpu.memory_space<smem>>, %arg13: memref<1x1xf32, #tpu.memory_space<smem>>, %arg14: memref<1x1xf32, #tpu.memory_space<smem>>) attributes {dimension_semantics = [], scalar_prefetch = 0 : i64, scratch_operands = 0 : i64, tpu.core_type = #tpu.core_type<tc>} {
    %c0 = arith.constant 0 : index
    %c0_0 = arith.constant 0 : index
    %0 = vector.load %arg0[%c0, %c0_0] : memref<8x256xf32, #tpu.memory_space<vmem>>, vector<8x256xf32>
    %1 = arith.truncf %0 : vector<8x256xf32> to vector<8x256xbf16>
    %c0_1 = arith.constant 0 : index
    %c0_2 = arith.constant 0 : index
    %2 = vector.load %arg1[%c0_1, %c0_2] : memref<256x32xbf16, #tpu.memory_space<vmem>>, vector<256x32xbf16>
    %cst = arith.constant dense<0.000000e+00> : vector<8x32xf32>
    %3 = tpu.matmul %1, %2, %cst {dimension_numbers = #tpu.dot_dimension_numbers<[1], [0], [0], [1], [0, 0, 1, 1], [], []>} : vector<8x256xbf16>, vector<256x32xbf16>, vector<8x32xf32> -> vector<8x32xf32>
    %c0_3 = arith.constant 0 : index
    %c0_4 = arith.constant 0 : index
    %4 = vector.load %arg2[%c0_3, %c0_4] : memref<1x32xf32, #tpu.memory_space<vmem>>, vector<1x32xf32>
    %5 = vector.broadcast %4 : vector<1x32xf32> to vector<8x32xf32>
    %6 = arith.addf %3, %5 : vector<8x32xf32>
    %c0_5 = arith.constant 0 : index
    %c0_6 = arith.constant 0 : index
    %7 = vector.load %arg3[%c0_5, %c0_6] : memref<32x32xf32, #tpu.memory_space<vmem>>, vector<32x32xf32>
    %cst_7 = arith.constant dense<0.000000e+00> : vector<8x32xf32>
    %8 = tpu.matmul %6, %7, %cst_7 {dimension_numbers = #tpu.dot_dimension_numbers<[1], [0], [0], [1], [0, 0, 1, 1], [], []>} : vector<8x32xf32>, vector<32x32xf32>, vector<8x32xf32> -> vector<8x32xf32>
    %c0_8 = arith.constant 0 : index
    %c0_9 = arith.constant 0 : index
    %9 = vector.load %arg4[%c0_8, %c0_9] : memref<1x32xf32, #tpu.memory_space<vmem>>, vector<1x32xf32>
    %10 = vector.broadcast %9 : vector<1x32xf32> to vector<8x32xf32>
    %11 = arith.addf %8, %10 : vector<8x32xf32>
    %c0_10 = arith.constant 0 : index
    %c0_11 = arith.constant 0 : index
    %12 = vector.load %arg5[%c0_10, %c0_11] : memref<64x32xf32, #tpu.memory_space<vmem>>, vector<64x32xf32>
    %cst_12 = arith.constant dense<0.000000e+00> : vector<8x64xf32>
    %13 = tpu.matmul %11, %12, %cst_12 {dimension_numbers = #tpu.dot_dimension_numbers<[1], [1], [0], [0], [0, 0, 1, 0], [], []>} : vector<8x32xf32>, vector<64x32xf32>, vector<8x64xf32> -> vector<8x64xf32>
    %c0_13 = arith.constant 0 : index
    %c0_14 = arith.constant 0 : index
    %14 = vector.load %arg6[%c0_13, %c0_14] : memref<1x64xf32, #tpu.memory_space<vmem>>, vector<1x64xf32>
    %15 = vector.broadcast %14 : vector<1x64xf32> to vector<8x64xf32>
    %16 = arith.subf %15, %13 : vector<8x64xf32>
    %cst_15 = arith.constant dense<0x7F800000> : vector<8xf32>
    %17 = vector.multi_reduction <minimumf>, %16, %cst_15 [1] : vector<8x64xf32> to vector<8xf32>
    %18 = vector.shape_cast %17 : vector<8xf32> to vector<8x1xf32>
    %19 = tpu.iota {dimensions = array<i32: 1>} : vector<8x64xi32>
    %20 = vector.broadcast %18 : vector<8x1xf32> to vector<8x64xf32>
    %21 = arith.cmpf ole, %16, %20 : vector<8x64xf32>
    %c64_i32 = arith.constant 64 : i32
    %22 = vector.broadcast %c64_i32 : i32 to vector<8x64xi32>
    %23 = arith.select %21, %19, %22 : vector<8x64xi1>, vector<8x64xi32>
    %cst_16 = arith.constant dense<2147483647> : vector<8xi32>
    %24 = vector.multi_reduction <minsi>, %23, %cst_16 [1] : vector<8x64xi32> to vector<8xi32>
    %25 = vector.shape_cast %24 : vector<8xi32> to vector<8x1xi32>
    %26 = vector.broadcast %25 : vector<8x1xi32> to vector<8x64xi32>
    %27 = arith.cmpi eq, %19, %26 : vector<8x64xi32>
    %28 = arith.extui %27 : vector<8x64xi1> to vector<8x64xi32>
    %29 = arith.sitofp %28 : vector<8x64xi32> to vector<8x64xf32>
    %cst_17 = arith.constant dense<0.000000e+00> : vector<8x32xf32>
    %30 = tpu.matmul %29, %12, %cst_17 {dimension_numbers = #tpu.dot_dimension_numbers<[1], [0], [0], [1], [0, 0, 1, 1], [], []>} : vector<8x64xf32>, vector<64x32xf32>, vector<8x32xf32> -> vector<8x32xf32>
    %31 = arith.sitofp %25 : vector<8x1xi32> to vector<8x1xf32>
    %32 = tpu.iota {dimensions = array<i32: 0>} : vector<8x1xi32>
    %c0_i32 = arith.constant 0 : i32
    %33 = vector.broadcast %c0_i32 : i32 to vector<8x1xi32>
    %34 = arith.cmpi eq, %32, %33 : vector<8x1xi32>
    %cst_18 = arith.constant 0.000000e+00 : f32
    %35 = vector.broadcast %cst_18 : f32 to vector<8x1xf32>
    %36 = arith.select %34, %31, %35 : vector<8x1xi1>, vector<8x1xf32>
    %37 = vector.shape_cast %36 : vector<8x1xf32> to vector<1x8x1xf32>
    %cst_19 = arith.constant dense<0.000000e+00> : vector<1xf32>
    %38 = vector.multi_reduction <add>, %37, %cst_19 [1, 2] : vector<1x8x1xf32> to vector<1xf32>
    %39 = vector.shape_cast %38 : vector<1xf32> to vector<1x1x1xf32>
    %40 = vector.extract %39[0, 0, 0] : f32 from vector<1x1x1xf32>
    %41 = arith.fptosi %40 : f32 to i32
    %c0_20 = arith.constant 0 : index
    %c0_21 = arith.constant 0 : index
    %42 = memref.load %arg12[%c0_20, %c0_21] : memref<1x8xi32, #tpu.memory_space<smem>>
    memref.store %41, %arg12[%c0_20, %c0_21] : memref<1x8xi32, #tpu.memory_space<smem>>
    %c1_i32 = arith.constant 1 : i32
    %43 = vector.broadcast %c1_i32 : i32 to vector<8x1xi32>
    %44 = arith.cmpi eq, %32, %43 : vector<8x1xi32>
    %cst_22 = arith.constant 0.000000e+00 : f32
    %45 = vector.broadcast %cst_22 : f32 to vector<8x1xf32>
    %46 = arith.select %44, %31, %45 : vector<8x1xi1>, vector<8x1xf32>
    %47 = vector.shape_cast %46 : vector<8x1xf32> to vector<1x8x1xf32>
    %cst_23 = arith.constant dense<0.000000e+00> : vector<1xf32>
    %48 = vector.multi_reduction <add>, %47, %cst_23 [1, 2] : vector<1x8x1xf32> to vector<1xf32>
    %49 = vector.shape_cast %48 : vector<1xf32> to vector<1x1x1xf32>
    %50 = vector.extract %49[0, 0, 0] : f32 from vector<1x1x1xf32>
    %51 = arith.fptosi %50 : f32 to i32
    %c0_24 = arith.constant 0 : index
    %c1 = arith.constant 1 : index
    %52 = memref.load %arg12[%c0_24, %c1] : memref<1x8xi32, #tpu.memory_space<smem>>
    memref.store %51, %arg12[%c0_24, %c1] : memref<1x8xi32, #tpu.memory_space<smem>>
    %c2_i32 = arith.constant 2 : i32
    %53 = vector.broadcast %c2_i32 : i32 to vector<8x1xi32>
    %54 = arith.cmpi eq, %32, %53 : vector<8x1xi32>
    %cst_25 = arith.constant 0.000000e+00 : f32
    %55 = vector.broadcast %cst_25 : f32 to vector<8x1xf32>
    %56 = arith.select %54, %31, %55 : vector<8x1xi1>, vector<8x1xf32>
    %57 = vector.shape_cast %56 : vector<8x1xf32> to vector<1x8x1xf32>
    %cst_26 = arith.constant dense<0.000000e+00> : vector<1xf32>
    %58 = vector.multi_reduction <add>, %57, %cst_26 [1, 2] : vector<1x8x1xf32> to vector<1xf32>
    %59 = vector.shape_cast %58 : vector<1xf32> to vector<1x1x1xf32>
    %60 = vector.extract %59[0, 0, 0] : f32 from vector<1x1x1xf32>
    %61 = arith.fptosi %60 : f32 to i32
    %c0_27 = arith.constant 0 : index
    %c2 = arith.constant 2 : index
    %62 = memref.load %arg12[%c0_27, %c2] : memref<1x8xi32, #tpu.memory_space<smem>>
    memref.store %61, %arg12[%c0_27, %c2] : memref<1x8xi32, #tpu.memory_space<smem>>
    %c3_i32 = arith.constant 3 : i32
    %63 = vector.broadcast %c3_i32 : i32 to vector<8x1xi32>
    %64 = arith.cmpi eq, %32, %63 : vector<8x1xi32>
    %cst_28 = arith.constant 0.000000e+00 : f32
    %65 = vector.broadcast %cst_28 : f32 to vector<8x1xf32>
    %66 = arith.select %64, %31, %65 : vector<8x1xi1>, vector<8x1xf32>
    %67 = vector.shape_cast %66 : vector<8x1xf32> to vector<1x8x1xf32>
    %cst_29 = arith.constant dense<0.000000e+00> : vector<1xf32>
    %68 = vector.multi_reduction <add>, %67, %cst_29 [1, 2] : vector<1x8x1xf32> to vector<1xf32>
    %69 = vector.shape_cast %68 : vector<1xf32> to vector<1x1x1xf32>
    %70 = vector.extract %69[0, 0, 0] : f32 from vector<1x1x1xf32>
    %71 = arith.fptosi %70 : f32 to i32
    %c0_30 = arith.constant 0 : index
    %c3 = arith.constant 3 : index
    %72 = memref.load %arg12[%c0_30, %c3] : memref<1x8xi32, #tpu.memory_space<smem>>
    memref.store %71, %arg12[%c0_30, %c3] : memref<1x8xi32, #tpu.memory_space<smem>>
    %c4_i32 = arith.constant 4 : i32
    %73 = vector.broadcast %c4_i32 : i32 to vector<8x1xi32>
    %74 = arith.cmpi eq, %32, %73 : vector<8x1xi32>
    %cst_31 = arith.constant 0.000000e+00 : f32
    %75 = vector.broadcast %cst_31 : f32 to vector<8x1xf32>
    %76 = arith.select %74, %31, %75 : vector<8x1xi1>, vector<8x1xf32>
    %77 = vector.shape_cast %76 : vector<8x1xf32> to vector<1x8x1xf32>
    %cst_32 = arith.constant dense<0.000000e+00> : vector<1xf32>
    %78 = vector.multi_reduction <add>, %77, %cst_32 [1, 2] : vector<1x8x1xf32> to vector<1xf32>
    %79 = vector.shape_cast %78 : vector<1xf32> to vector<1x1x1xf32>
    %80 = vector.extract %79[0, 0, 0] : f32 from vector<1x1x1xf32>
    %81 = arith.fptosi %80 : f32 to i32
    %c0_33 = arith.constant 0 : index
    %c4 = arith.constant 4 : index
    %82 = memref.load %arg12[%c0_33, %c4] : memref<1x8xi32, #tpu.memory_space<smem>>
    memref.store %81, %arg12[%c0_33, %c4] : memref<1x8xi32, #tpu.memory_space<smem>>
    %c5_i32 = arith.constant 5 : i32
    %83 = vector.broadcast %c5_i32 : i32 to vector<8x1xi32>
    %84 = arith.cmpi eq, %32, %83 : vector<8x1xi32>
    %cst_34 = arith.constant 0.000000e+00 : f32
    %85 = vector.broadcast %cst_34 : f32 to vector<8x1xf32>
    %86 = arith.select %84, %31, %85 : vector<8x1xi1>, vector<8x1xf32>
    %87 = vector.shape_cast %86 : vector<8x1xf32> to vector<1x8x1xf32>
    %cst_35 = arith.constant dense<0.000000e+00> : vector<1xf32>
    %88 = vector.multi_reduction <add>, %87, %cst_35 [1, 2] : vector<1x8x1xf32> to vector<1xf32>
    %89 = vector.shape_cast %88 : vector<1xf32> to vector<1x1x1xf32>
    %90 = vector.extract %89[0, 0, 0] : f32 from vector<1x1x1xf32>
    %91 = arith.fptosi %90 : f32 to i32
    %c0_36 = arith.constant 0 : index
    %c5 = arith.constant 5 : index
    %92 = memref.load %arg12[%c0_36, %c5] : memref<1x8xi32, #tpu.memory_space<smem>>
    memref.store %91, %arg12[%c0_36, %c5] : memref<1x8xi32, #tpu.memory_space<smem>>
    %c6_i32 = arith.constant 6 : i32
    %93 = vector.broadcast %c6_i32 : i32 to vector<8x1xi32>
    %94 = arith.cmpi eq, %32, %93 : vector<8x1xi32>
    %cst_37 = arith.constant 0.000000e+00 : f32
    %95 = vector.broadcast %cst_37 : f32 to vector<8x1xf32>
    %96 = arith.select %94, %31, %95 : vector<8x1xi1>, vector<8x1xf32>
    %97 = vector.shape_cast %96 : vector<8x1xf32> to vector<1x8x1xf32>
    %cst_38 = arith.constant dense<0.000000e+00> : vector<1xf32>
    %98 = vector.multi_reduction <add>, %97, %cst_38 [1, 2] : vector<1x8x1xf32> to vector<1xf32>
    %99 = vector.shape_cast %98 : vector<1xf32> to vector<1x1x1xf32>
    %100 = vector.extract %99[0, 0, 0] : f32 from vector<1x1x1xf32>
    %101 = arith.fptosi %100 : f32 to i32
    %c0_39 = arith.constant 0 : index
    %c6 = arith.constant 6 : index
    %102 = memref.load %arg12[%c0_39, %c6] : memref<1x8xi32, #tpu.memory_space<smem>>
    memref.store %101, %arg12[%c0_39, %c6] : memref<1x8xi32, #tpu.memory_space<smem>>
    %c7_i32 = arith.constant 7 : i32
    %103 = vector.broadcast %c7_i32 : i32 to vector<8x1xi32>
    %104 = arith.cmpi eq, %32, %103 : vector<8x1xi32>
    %cst_40 = arith.constant 0.000000e+00 : f32
    %105 = vector.broadcast %cst_40 : f32 to vector<8x1xf32>
    %106 = arith.select %104, %31, %105 : vector<8x1xi1>, vector<8x1xf32>
    %107 = vector.shape_cast %106 : vector<8x1xf32> to vector<1x8x1xf32>
    %cst_41 = arith.constant dense<0.000000e+00> : vector<1xf32>
    %108 = vector.multi_reduction <add>, %107, %cst_41 [1, 2] : vector<1x8x1xf32> to vector<1xf32>
    %109 = vector.shape_cast %108 : vector<1xf32> to vector<1x1x1xf32>
    %110 = vector.extract %109[0, 0, 0] : f32 from vector<1x1x1xf32>
    %111 = arith.fptosi %110 : f32 to i32
    %c0_42 = arith.constant 0 : index
    %c7 = arith.constant 7 : index
    %112 = memref.load %arg12[%c0_42, %c7] : memref<1x8xi32, #tpu.memory_space<smem>>
    memref.store %111, %arg12[%c0_42, %c7] : memref<1x8xi32, #tpu.memory_space<smem>>
    %113 = tpu.iota {dimensions = array<i32: 0>} : vector<8x1xi32>
    %c2_i32_43 = arith.constant 2 : i32
    %114 = vector.broadcast %c2_i32_43 : i32 to vector<8x1xi32>
    %115 = arith.cmpi slt, %113, %114 : vector<8x1xi32>
    %116 = arith.extui %115 : vector<8x1xi1> to vector<8x1xi32>
    %117 = arith.sitofp %116 : vector<8x1xi32> to vector<8x1xf32>
    %118 = arith.subf %30, %11 : vector<8x32xf32>
    %119 = vector.broadcast %117 : vector<8x1xf32> to vector<8x32xf32>
    %120 = arith.mulf %118, %119 : vector<8x32xf32>
    %121 = arith.mulf %120, %120 : vector<8x32xf32>
    %122 = vector.shape_cast %121 : vector<8x32xf32> to vector<1x8x32xf32>
    %cst_44 = arith.constant dense<0.000000e+00> : vector<1xf32>
    %123 = vector.multi_reduction <add>, %122, %cst_44 [1, 2] : vector<1x8x32xf32> to vector<1xf32>
    %124 = vector.shape_cast %123 : vector<1xf32> to vector<1x1x1xf32>
    %125 = vector.extract %124[0, 0, 0] : f32 from vector<1x1x1xf32>
    %cst_45 = arith.constant 1.250000e+00 : f32
    %126 = arith.mulf %cst_45, %125 : f32
    %cst_46 = arith.constant 6.400000e+01 : f32
    %127 = arith.divf %126, %cst_46 : f32
    %c0_47 = arith.constant 0 : index
    %c0_48 = arith.constant 0 : index
    %128 = memref.load %arg13[%c0_47, %c0_48] : memref<1x1xf32, #tpu.memory_space<smem>>
    memref.store %127, %arg13[%c0_47, %c0_48] : memref<1x1xf32, #tpu.memory_space<smem>>
    %c0_49 = arith.constant 0 : index
    %c0_50 = arith.constant 0 : index
    %129 = vector.load %arg7[%c0_49, %c0_50] : memref<32x32xf32, #tpu.memory_space<vmem>>, vector<32x32xf32>
    %cst_51 = arith.constant dense<0.000000e+00> : vector<8x32xf32>
    %130 = tpu.matmul %30, %129, %cst_51 {dimension_numbers = #tpu.dot_dimension_numbers<[1], [0], [0], [1], [0, 0, 1, 1], [], []>} : vector<8x32xf32>, vector<32x32xf32>, vector<8x32xf32> -> vector<8x32xf32>
    %c0_52 = arith.constant 0 : index
    %c0_53 = arith.constant 0 : index
    %131 = vector.load %arg8[%c0_52, %c0_53] : memref<1x32xf32, #tpu.memory_space<vmem>>, vector<1x32xf32>
    %132 = vector.broadcast %131 : vector<1x32xf32> to vector<8x32xf32>
    %133 = arith.addf %130, %132 : vector<8x32xf32>
    %cst_54 = arith.constant 0.000000e+00 : f32
    %134 = vector.broadcast %cst_54 : f32 to vector<8x32xf32>
    %135 = arith.maximumf %133, %134 : vector<8x32xf32>
    %136 = arith.truncf %135 : vector<8x32xf32> to vector<8x32xbf16>
    %c0_55 = arith.constant 0 : index
    %c0_56 = arith.constant 0 : index
    %137 = vector.load %arg9[%c0_55, %c0_56] : memref<32x256xbf16, #tpu.memory_space<vmem>>, vector<32x256xbf16>
    %cst_57 = arith.constant dense<0.000000e+00> : vector<8x256xf32>
    %138 = tpu.matmul %136, %137, %cst_57 {dimension_numbers = #tpu.dot_dimension_numbers<[1], [0], [0], [1], [0, 0, 1, 1], [], []>} : vector<8x32xbf16>, vector<32x256xbf16>, vector<8x256xf32> -> vector<8x256xf32>
    %c0_58 = arith.constant 0 : index
    %c0_59 = arith.constant 0 : index
    %139 = vector.load %arg10[%c0_58, %c0_59] : memref<1x256xf32, #tpu.memory_space<vmem>>, vector<1x256xf32>
    %140 = vector.broadcast %139 : vector<1x256xf32> to vector<8x256xf32>
    %141 = arith.addf %138, %140 : vector<8x256xf32>
    %c0_60 = arith.constant 0 : index
    %c0_61 = arith.constant 0 : index
    %142 = vector.load %arg11[%c0_60, %c0_61] : memref<8x256xf32, #tpu.memory_space<vmem>>, vector<8x256xf32>
    tpu.vector_store %arg11[%c0_60, %c0_61], %141 {strides = array<i32>} : memref<8x256xf32, #tpu.memory_space<vmem>>, vector<8x256xf32>,
    %143 = arith.subf %141, %0 : vector<8x256xf32>
    %144 = vector.broadcast %117 : vector<8x1xf32> to vector<8x256xf32>
    %145 = arith.mulf %143, %144 : vector<8x256xf32>
    %146 = arith.mulf %145, %145 : vector<8x256xf32>
    %147 = vector.shape_cast %146 : vector<8x256xf32> to vector<1x8x256xf32>
    %cst_62 = arith.constant dense<0.000000e+00> : vector<1xf32>
    %148 = vector.multi_reduction <add>, %147, %cst_62 [1, 2] : vector<1x8x256xf32> to vector<1xf32>
    %149 = vector.shape_cast %148 : vector<1xf32> to vector<1x1x1xf32>
    %150 = vector.extract %149[0, 0, 0] : f32 from vector<1x1x1xf32>
    %cst_63 = arith.constant 5.120000e+02 : f32
    %151 = arith.divf %150, %cst_63 : f32
    %c0_64 = arith.constant 0 : index
    %c0_65 = arith.constant 0 : index
    %152 = memref.load %arg14[%c0_64, %c0_65] : memref<1x1xf32, #tpu.memory_space<smem>>
    memref.store %151, %arg14[%c0_64, %c0_65] : memref<1x1xf32, #tpu.memory_space<smem>>
    return
  }
}

</mosaic_0001>

<llo_original>
// kernel: encoder_vqvae_forward.1
$region0: #{encoder_vqvae_forward.1}
  #allocation0 [shape = 'u32[]', space=smem, size = 0x4, offset = 0x4, fixed_abs, tag = 'smem constant byte address 0x4 - core index']
  #allocation1 [shape = 'u32[72,128]{1,0:T(1,128)}', space=vmem, size = 0x9000, scoped, tag = 'internal scratch']
  %s0 = inlined_call_operand.vmem [shape: f32[8,256], index: 0, kind: input, shape index: {}]
  %s1 = inlined_call_operand.vmem [shape: bf16[256,32], index: 1, kind: input, shape index: {}]
  %s2 = inlined_call_operand.vmem [shape: f32[1,32], index: 2, kind: input, shape index: {}]
  %s3 = inlined_call_operand.vmem [shape: f32[32,32], index: 3, kind: input, shape index: {}]
  %s4 = inlined_call_operand.vmem [shape: f32[1,32], index: 4, kind: input, shape index: {}]
  %s5 = inlined_call_operand.vmem [shape: f32[64,32], index: 5, kind: input, shape index: {}]
  %s6 = inlined_call_operand.vmem [shape: f32[1,64], index: 6, kind: input, shape index: {}]
  %s7 = inlined_call_operand.vmem [shape: f32[32,32], index: 7, kind: input, shape index: {}]
  %s8 = inlined_call_operand.vmem [shape: f32[1,32], index: 8, kind: input, shape index: {}]
  %s9 = inlined_call_operand.vmem [shape: bf16[32,256], index: 9, kind: input, shape index: {}]
  %s10 = inlined_call_operand.vmem [shape: f32[1,256], index: 10, kind: input, shape index: {}]
  %s11 = inlined_call_operand.vmem [shape: f32[8,256], index: 11, kind: output, shape index: {0}]
  %s12 = inlined_call_operand.vmem [shape: s32[1,8], index: 12, kind: output, shape index: {1}]
  %s13 = inlined_call_operand.hbm [shape: f32[1,1], index: 13, kind: output, shape index: {2}]
  %s14 = inlined_call_operand.hbm [shape: f32[1,1], index: 14, kind: output, shape index: {3}]
  %15 = xla_tuple %s11, %s12, %s13, %s14
  %s16 = sld [smem:[#allocation0]]
  $region78: #{encoder_vqvae_forward.1} parent=0
    _
  %s18 = ssub.s32 1, %s16
  %s19 = scalar_select 0, %s18, %s16
  $region1: #{encoder_vqvae_forward.1} parent=0
    #allocation2 [shape = 'u8[512]{0}', space=smem, size = 0x200, scoped, tag = 'output window, operand 1, single buffered']
    #allocation3 [shape = 's32[1]{0}', space=sflag, size = 0x4, scoped, tag = 'scoped memory for encoder_vqvae_forward.1']
    #allocation4 [shape = 's32[1]{0}', space=sflag, size = 0x4, scoped, tag = 'scoped memory for encoder_vqvae_forward.1']
    #allocation5 [shape = 'u8[512]{0}', space=smem, size = 0x200, scoped, tag = 'output window, operand 2, single buffered']
    #allocation6 [shape = 'u8[512]{0}', space=smem, size = 0x200, scoped, tag = 'output window, operand 3, single buffered']
    #allocation7 [shape = 's32[1]{0}', space=sflag, size = 0x4, scoped, tag = 'scoped memory for encoder_vqvae_forward.1']
    %20 = vsyncpa [#allocation4], 0
    %21 = vsyncpa [#allocation3], 0
    %22 = vsyncpa [#allocation7], 0
    // Predicated region
    $region2: #{encoder_vqvae_forward.1} parent=1 // pred_check
      _
    $region3: #{encoder_vqvae_forward.1} parent=1 // pred_check_branch
      %24 = sbr.rel (0) target = $region5
    $region4: #{encoder_vqvae_forward.1} parent=1 // pred_region
      _
    $region5: #{encoder_vqvae_forward.1} parent=1 // pred_fallthru
      _
    // Predicated region
    $region6: #{encoder_vqvae_forward.1} parent=1 // pred_check
      _
    $region7: #{encoder_vqvae_forward.1} parent=1 // pred_check_branch
      %26 = sbr.rel (0) target = $region9
    $region8: #{encoder_vqvae_forward.1} parent=1 // pred_region
      _
    $region9: #{encoder_vqvae_forward.1} parent=1 // pred_fallthru
      _
    // Predicated region
    $region10: #{encoder_vqvae_forward.1} parent=1 // pred_check
      _
    $region11: #{encoder_vqvae_forward.1} parent=1 // pred_check_branch
      %28 = sbr.rel (0) target = $region13
    $region12: #{encoder_vqvae_forward.1} parent=1 // pred_region
      _
    $region13: #{encoder_vqvae_forward.1} parent=1 // pred_fallthru
      _
    // Predicated region
    $region14: #{encoder_vqvae_forward.1} parent=1 // pred_check
      _
    $region15: #{encoder_vqvae_forward.1} parent=1 // pred_check_branch
      %30 = sbr.rel (0) target = $region17
    $region16: #{encoder_vqvae_forward.1} parent=1 // pred_region
      _
    $region17: #{encoder_vqvae_forward.1} parent=1 // pred_fallthru
      _
    // Predicated region
    $region18: #{encoder_vqvae_forward.1} parent=1 // pred_check
      _
    $region19: #{encoder_vqvae_forward.1} parent=1 // pred_check_branch
      %32 = sbr.rel (0) target = $region21
    $region20: #{encoder_vqvae_forward.1} parent=1 // pred_region
      _
    $region21: #{encoder_vqvae_forward.1} parent=1 // pred_fallthru
      _
    // Predicated region
    $region22: #{encoder_vqvae_forward.1} parent=1 // pred_check
      _
    $region23: #{encoder_vqvae_forward.1} parent=1 // pred_check_branch
      %34 = sbr.rel (0) target = $region25
    $region24: #{encoder_vqvae_forward.1} parent=1 // pred_region
      _
    $region25: #{encoder_vqvae_forward.1} parent=1 // pred_fallthru
      _
    // Predicated region
    $region26: #{encoder_vqvae_forward.1} parent=1 // pred_check
      _
    $region27: #{encoder_vqvae_forward.1} parent=1 // pred_check_branch
      %36 = sbr.rel (0) target = $region29
    $region28: #{encoder_vqvae_forward.1} parent=1 // pred_region
      _
    $region29: #{encoder_vqvae_forward.1} parent=1 // pred_fallthru
      _
    // Predicated region
    $region30: #{encoder_vqvae_forward.1} parent=1 // pred_check
      _
    $region31: #{encoder_vqvae_forward.1} parent=1 // pred_check_branch
      %38 = sbr.rel (0) target = $region33
    $region32: #{encoder_vqvae_forward.1} parent=1 // pred_region
      _
    $region33: #{encoder_vqvae_forward.1} parent=1 // pred_fallthru
      _
    // Predicated region
    $region34: #{encoder_vqvae_forward.1} parent=1 // pred_check
      _
    $region35: #{encoder_vqvae_forward.1} parent=1 // pred_check_branch
      %40 = sbr.rel (0) target = $region37
    $region36: #{encoder_vqvae_forward.1} parent=1 // pred_region
      _
    $region37: #{encoder_vqvae_forward.1} parent=1 // pred_fallthru
      _
    // Predicated region
    $region38: #{encoder_vqvae_forward.1} parent=1 // pred_check
      _
    $region39: #{encoder_vqvae_forward.1} parent=1 // pred_check_branch
      %42 = sbr.rel (0) target = $region41
    $region40: #{encoder_vqvae_forward.1} parent=1 // pred_region
      _
    $region41: #{encoder_vqvae_forward.1} parent=1 // pred_fallthru
      _
    // Predicated region
    $region42: #{encoder_vqvae_forward.1} parent=1 // pred_check
      _
    $region43: #{encoder_vqvae_forward.1} parent=1 // pred_check_branch
      %44 = sbr.rel (0) target = $region45
    $region44: #{encoder_vqvae_forward.1} parent=1 // pred_region
      _
    $region45: #{encoder_vqvae_forward.1} parent=1 // pred_fallthru
      _
    %v46 = vld [vmem:[%s0] sm:$0xff]
    %v47 = vld [vmem:[%s0 + $0x8] sm:$0xff]
    %v48 = vpack.c.bf16 %v46, %v46
    %v49 = vpack.c.bf16 %v47, %v47
    %v50 = vld [vmem:[%s1] sm:$0xf]
    %v51 = vld [vmem:[%s1 + $0x4] sm:$0xf]
    %v52 = vld [vmem:[%s1 + $0x8] sm:$0xf]
    %v53 = vld [vmem:[%s1 + $0xc] sm:$0xf]
    %v54 = vld [vmem:[%s1 + $0x10] sm:$0xf]
    %v55 = vld [vmem:[%s1 + $0x14] sm:$0xf]
    %v56 = vld [vmem:[%s1 + $0x18] sm:$0xf]
    %v57 = vld [vmem:[%s1 + $0x1c] sm:$0xf]
    %v58 = vld [vmem:[%s1 + $0x20] sm:$0xf]
    %v59 = vld [vmem:[%s1 + $0x24] sm:$0xf]
    %v60 = vld [vmem:[%s1 + $0x28] sm:$0xf]
    %v61 = vld [vmem:[%s1 + $0x2c] sm:$0xf]
    %v62 = vld [vmem:[%s1 + $0x30] sm:$0xf]
    %v63 = vld [vmem:[%s1 + $0x34] sm:$0xf]
    %v64 = vld [vmem:[%s1 + $0x38] sm:$0xf]
    %v65 = vld [vmem:[%s1 + $0x3c] sm:$0xf]
    %v66 = vld [vmem:[%s1 + $0x40] sm:$0xf]
    %v67 = vld [vmem:[%s1 + $0x44] sm:$0xf]
    %v68 = vld [vmem:[%s1 + $0x48] sm:$0xf]
    %v69 = vld [vmem:[%s1 + $0x4c] sm:$0xf]
    %v70 = vld [vmem:[%s1 + $0x50] sm:$0xf]
    %v71 = vld [vmem:[%s1 + $0x54] sm:$0xf]
    %v72 = vld [vmem:[%s1 + $0x58] sm:$0xf]
    %v73 = vld [vmem:[%s1 + $0x5c] sm:$0xf]
    %v74 = vld [vmem:[%s1 + $0x60] sm:$0xf]
    %v75 = vld [vmem:[%s1 + $0x64] sm:$0xf]
    %v76 = vld [vmem:[%s1 + $0x68] sm:$0xf]
    %v77 = vld [vmem:[%s1 + $0x6c] sm:$0xf]
    %v78 = vld [vmem:[%s1 + $0x70] sm:$0xf]
    %v79 = vld [vmem:[%s1 + $0x74] sm:$0xf]
    %v80 = vld [vmem:[%s1 + $0x78] sm:$0xf]
    %v81 = vld [vmem:[%s1 + $0x7c] sm:$0xf]
    %v82 = vld [vmem:[%s2] sm:$0x1]
    %v84 = vperm.slane %v82, 0
    %v118 = vunpack.c.l.b16 %v50
    %v119 = vunpack.c.l.b16 %v51
    %v120 = vunpack.c.l.b16 %v52
    %v121 = vunpack.c.l.b16 %v53
    %v122 = vunpack.c.l.b16 %v54
    %v123 = vunpack.c.l.b16 %v55
    %v124 = vunpack.c.l.b16 %v56
    %v125 = vunpack.c.l.b16 %v57
    %v126 = vunpack.c.l.b16 %v58
    %v127 = vunpack.c.l.b16 %v59
    %v128 = vunpack.c.l.b16 %v60
    %v129 = vunpack.c.l.b16 %v61
    %v130 = vunpack.c.l.b16 %v62
    %v131 = vunpack.c.l.b16 %v63
    %v132 = vunpack.c.l.b16 %v64
    %v133 = vunpack.c.l.b16 %v65
    %v134 = vunpack.c.l.b16 %v66
    %v135 = vunpack.c.l.b16 %v67
    %v136 = vunpack.c.l.b16 %v68
    %v137 = vunpack.c.l.b16 %v69
    %v138 = vunpack.c.l.b16 %v70
    %v139 = vunpack.c.l.b16 %v71
    %v140 = vunpack.c.l.b16 %v72
    %v141 = vunpack.c.l.b16 %v73
    %v142 = vunpack.c.l.b16 %v74
    %v143 = vunpack.c.l.b16 %v75
    %v144 = vunpack.c.l.b16 %v76
    %v145 = vunpack.c.l.b16 %v77
    %v146 = vunpack.c.l.b16 %v78
    %v147 = vunpack.c.l.b16 %v79
    %v148 = vunpack.c.l.b16 %v80
    %v149 = vunpack.c.l.b16 %v81
    %v150 = vpack.c.b16 %v119, %v118
    %v151 = vpack.c.b16 %v121, %v120
    %v152 = vpack.c.b16 %v123, %v122
    %v153 = vpack.c.b16 %v125, %v124
    %v154 = vpack.c.b16 %v127, %v126
    %v155 = vpack.c.b16 %v129, %v128
    %v156 = vpack.c.b16 %v131, %v130
    %v157 = vpack.c.b16 %v133, %v132
    %v158 = vpack.c.b16 %v135, %v134
    %v159 = vpack.c.b16 %v137, %v136
    %v160 = vpack.c.b16 %v139, %v138
    %v161 = vpack.c.b16 %v141, %v140
    %v162 = vpack.c.b16 %v143, %v142
    %v163 = vpack.c.b16 %v145, %v144
    %v164 = vpack.c.b16 %v147, %v146
    %v165 = vpack.c.b16 %v149, %v148
    %182 = vmatpush.bf16.msra.mxu0 %v157
    %183 = vmatpush.bf16.msra.mxu0 %v156
    %184 = vmatpush.bf16.msra.mxu0 %v155
    %185 = vmatpush.bf16.msra.mxu0 %v154
    %186 = vmatpush.bf16.msra.mxu0 %v153
    %187 = vmatpush.bf16.msra.mxu0 %v152
    %188 = vmatpush.bf16.msra.mxu0 %v151
    %189 = vmatpush.bf16.msra.mxu0 %v150
    %190 = vmatmul.bf16.gmra.mxu0 %v48
    %v191 = vpop.f32.mrf.mxu0
    %v192 = vadd.f32 %v84, %v191
    %v193 = vpop.f32.mrf.mxu0
    %194 = vdwg.mxu0
    %195 = vmatpush.bf16.msra.mxu0 %v165
    %196 = vmatpush.bf16.msra.mxu0 %v164
    %197 = vmatpush.bf16.msra.mxu0 %v163
    %198 = vmatpush.bf16.msra.mxu0 %v162
    %199 = vmatpush.bf16.msra.mxu0 %v161
    %200 = vmatpush.bf16.msra.mxu0 %v160
    %201 = vmatpush.bf16.msra.mxu0 %v159
    %202 = vmatpush.bf16.msra.mxu0 %v158
    %203 = vmatmul.bf16.gmra.mxu0 %v49
    %v204 = vpop.f32.mrf.mxu0
    %v205 = vadd.f32 %v192, %v204
    %v206 = vpop.f32.mrf.mxu0
    %207 = vdwg.mxu0
    %v208 = vld [vmem:[%s3] sm:$0xff]
    %v209 = vld [vmem:[%s3 + $0x8] sm:$0xff]
    %v210 = vld [vmem:[%s3 + $0x10] sm:$0xff]
    %v211 = vld [vmem:[%s3 + $0x18] sm:$0xff]
    %v212 = vld [vmem:[%s4] sm:$0x1]
    %v214 = vperm.slane %v212, 0
    %vm216 = vcmask 261120
    %v218 = vsel %vm216, %v205, 0
    %220 = vmatpush.msra.mxu0 0.0
    %221 = vmatpush.msra.mxu0 0.0
    %222 = vmatpush.msra.mxu0 0.0
    %223 = vmatpush.msra.mxu0 0.0
    %224 = vmatpush.msra.mxu0 0.0
    %225 = vmatpush.msra.mxu0 0.0
    %226 = vmatpush.msra.mxu0 0.0
    %227 = vmatpush.msra.mxu0 0.0
    %228 = vmatpush.msra.mxu0 0.0
    %229 = vmatpush.msra.mxu0 0.0
    %230 = vmatpush.msra.mxu0 0.0
    %231 = vmatpush.msra.mxu0 0.0
    %232 = vmatpush.msra.mxu0 %v211
    %233 = vmatpush.msra.mxu0 %v210
    %234 = vmatpush.msra.mxu0 %v209
    %235 = vmatpush.msra.mxu0 %v208
    %236 = vmatmul.f32.gmra.mxu0 %v218
    %v237 = vpop.f32.mrf.mxu0
    %v238 = vadd.f32 %v214, %v237
    %239 = vdwg.mxu0
    %v240 = vld [vmem:[%s5] sm:$0xff]
    %v241 = vld [vmem:[%s5 + $0x8] sm:$0xff]
    %v242 = vld [vmem:[%s5 + $0x10] sm:$0xff]
    %v243 = vld [vmem:[%s5 + $0x18] sm:$0xff]
    %v244 = vld [vmem:[%s5 + $0x20] sm:$0xff]
    %v245 = vld [vmem:[%s5 + $0x28] sm:$0xff]
    %v246 = vld [vmem:[%s5 + $0x30] sm:$0xff]
    %v247 = vld [vmem:[%s5 + $0x38] sm:$0xff]
    %v249 = vsel %vm216, %v238, 0
    %v252 = vsel %vm216, %v240, 0
    %v255 = vsel %vm216, %v241, 0
    %v258 = vsel %vm216, %v242, 0
    %v261 = vsel %vm216, %v243, 0
    %v264 = vsel %vm216, %v244, 0
    %v267 = vsel %vm216, %v245, 0
    %v270 = vsel %vm216, %v246, 0
    %v273 = vsel %vm216, %v247, 0
    %275 = vmatpush.xpose.msra.mxu0 0.0
    %276 = vmatpush.xpose.msra.mxu0 0.0
    %277 = vmatpush.xpose.msra.mxu0 0.0
    %278 = vmatpush.xpose.msra.mxu0 0.0
    %279 = vmatpush.xpose.msra.mxu0 0.0
    %280 = vmatpush.xpose.msra.mxu0 0.0
    %281 = vmatpush.xpose.msra.mxu0 0.0
    %282 = vmatpush.xpose.msra.mxu0 0.0
    %283 = vmatpush.xpose.msra.mxu0 %v273
    %284 = vmatpush.xpose.msra.mxu0 %v270
    %285 = vmatpush.xpose.msra.mxu0 %v267
    %286 = vmatpush.xpose.msra.mxu0 %v264
    %287 = vmatpush.xpose.msra.mxu0 %v261
    %288 = vmatpush.xpose.msra.mxu0 %v258
    %289 = vmatpush.xpose.msra.mxu0 %v255
    %290 = vmatpush.xpose.msra.mxu0 %v252
    %291 = vmatmul.f32.gmra.mxu0 %v249
    %v292 = vpop.f32.mrf.mxu0
    %v293 = vadd.f32 0.0, %v292
    %294 = vdwg.mxu0
    %v295 = vld [vmem:[%s6] sm:$0x1]
    %v297 = vperm.slane %v295, 0
    %v299 = vsub.f32 %v297, %v293
    %vm300 = vcmask 523264
    %v301 = vsel %vm300, %v299, inf
    %302 = vmin.xlane.f32.xlu0 %v301
    %v303 = vpop.xlane.xlu0 %302
    %v304 = vlaneseq
    %v305 = vand.u32 %v304, 127
    %vm306 = vcmp.le.f32.partialorder %v299, %v303
    %v307 = vsel %vm306, %v305, 64
    %v308 = vsel %vm300, %v307, 2147483647
    %v309 = vand.u32 %v308, 65535
    %v310 = vshra.s32 %v308, 16
    %v311 = vcvt.s32.f32 %v309
    %v312 = vcvt.s32.f32 %v310
    %313 = vmin.xlane.f32.xlu0 %v312
    %v314 = vpop.xlane.xlu0 %313
    %vm315 = vcmp.eq.f32.partialorder %v312, %v314
    %v316 = vsel %vm315, %v311, inf
    %317 = vmin.xlane.f32.xlu0 %v316
    %v318 = vpop.xlane.xlu0 %317
    %v319 = vcvt.f32.s32 %v318
    %v320 = vcvt.f32.s32 %v314
    %v321 = vshll.u32 %v320, 16
    %v322 = vadd.s32 %v321, %v319
    %vm323 = vcmp.eq.s32.totalorder %v305, %v322
    %v324 = vsel %vm323, 1, 0
    %v325 = vcvt.s32.f32 %v324
    %v327 = vsel %vm300, %v325, 0
    %329 = vmatpush.msra.mxu0 0.0
    %330 = vmatpush.msra.mxu0 0.0
    %331 = vmatpush.msra.mxu0 0.0
    %332 = vmatpush.msra.mxu0 0.0
    %333 = vmatpush.msra.mxu0 0.0
    %334 = vmatpush.msra.mxu0 0.0
    %335 = vmatpush.msra.mxu0 0.0
    %336 = vmatpush.msra.mxu0 0.0
    %337 = vmatpush.msra.mxu0 %v247
    %338 = vmatpush.msra.mxu0 %v246
    %339 = vmatpush.msra.mxu0 %v245
    %340 = vmatpush.msra.mxu0 %v244
    %341 = vmatpush.msra.mxu0 %v243
    %342 = vmatpush.msra.mxu0 %v242
    %343 = vmatpush.msra.mxu0 %v241
    %344 = vmatpush.msra.mxu0 %v240
    %345 = vmatmul.f32.gmra.mxu0 %v327
    %v346 = vpop.f32.mrf.mxu0
    %v347 = vadd.f32 0.0, %v346
    %348 = vdwg.mxu0
    %v349 = vcvt.s32.f32 %v322
    %v350 = vlaneseq
    %v351 = vshrl.u32 %v350, 7
    %vm352 = vcmp.eq.s32.totalorder %v351, 0
    %v353 = vsel %vm352, %v349, 0.0
    %vm354 = vcmask 7168
    %v355 = vsel %vm354, %v353, 0.0
    %356 = vadd.xlane.f32.xlu0 %v355
    %v357 = vpop.xlane.xlu0 %356
    %v358 = vrot.slane %v357, 4
    %v359 = vadd.f32 %v357, %v358
    %v360 = vrot.slane %v359, 2
    %v361 = vadd.f32 %v359, %v360
    %v362 = vrot.slane %v361, 1
    %v363 = vadd.f32 %v361, %v362
    %s364 = vtos %v363
    %s365 = scvt.f32.s32.to.zero.pseudo %s364
    %s366 = scalar_lea.smem [#allocation2], 0
    %367 = sst [smem:[%s366]] %s365
    %vm368 = vcmp.eq.s32.totalorder %v351, 1
    %v369 = vsel %vm368, %v349, 0.0
    %v370 = vsel %vm354, %v369, 0.0
    %371 = vadd.xlane.f32.xlu0 %v370
    %v372 = vpop.xlane.xlu0 %371
    %v373 = vrot.slane %v372, 4
    %v374 = vadd.f32 %v372, %v373
    %v375 = vrot.slane %v374, 2
    %v376 = vadd.f32 %v374, %v375
    %v377 = vrot.slane %v376, 1
    %v378 = vadd.f32 %v376, %v377
    %s379 = vtos %v378
    %s380 = scvt.f32.s32.to.zero.pseudo %s379
    %s381 = scalar_lea.smem [#allocation2], 1
    %382 = sst [smem:[%s381]] %s380
    %vm383 = vcmp.eq.s32.totalorder %v351, 2
    %v384 = vsel %vm383, %v349, 0.0
    %v385 = vsel %vm354, %v384, 0.0
    %386 = vadd.xlane.f32.xlu0 %v385
    %v387 = vpop.xlane.xlu0 %386
    %v388 = vrot.slane %v387, 4
    %v389 = vadd.f32 %v387, %v388
    %v390 = vrot.slane %v389, 2
    %v391 = vadd.f32 %v389, %v390
    %v392 = vrot.slane %v391, 1
    %v393 = vadd.f32 %v391, %v392
    %s394 = vtos %v393
    %s395 = scvt.f32.s32.to.zero.pseudo %s394
    %s396 = scalar_lea.smem [#allocation2], 2
    %397 = sst [smem:[%s396]] %s395
    %vm398 = vcmp.eq.s32.totalorder %v351, 3
    %v399 = vsel %vm398, %v349, 0.0
    %v400 = vsel %vm354, %v399, 0.0
    %401 = vadd.xlane.f32.xlu0 %v400
    %v402 = vpop.xlane.xlu0 %401
    %v403 = vrot.slane %v402, 4
    %v404 = vadd.f32 %v402, %v403
    %v405 = vrot.slane %v404, 2
    %v406 = vadd.f32 %v404, %v405
    %v407 = vrot.slane %v406, 1
    %v408 = vadd.f32 %v406, %v407
    %s409 = vtos %v408
    %s410 = scvt.f32.s32.to.zero.pseudo %s409
    %s411 = scalar_lea.smem [#allocation2], 3
    %412 = sst [smem:[%s411]] %s410
    %vm413 = vcmp.eq.s32.totalorder %v351, 4
    %v414 = vsel %vm413, %v349, 0.0
    %v415 = vsel %vm354, %v414, 0.0
    %416 = vadd.xlane.f32.xlu0 %v415
    %v417 = vpop.xlane.xlu0 %416
    %v418 = vrot.slane %v417, 4
    %v419 = vadd.f32 %v417, %v418
    %v420 = vrot.slane %v419, 2
    %v421 = vadd.f32 %v419, %v420
    %v422 = vrot.slane %v421, 1
    %v423 = vadd.f32 %v421, %v422
    %s424 = vtos %v423
    %s425 = scvt.f32.s32.to.zero.pseudo %s424
    %s426 = scalar_lea.smem [#allocation2], 4
    %427 = sst [smem:[%s426]] %s425
    %vm428 = vcmp.eq.s32.totalorder %v351, 5
    %v429 = vsel %vm428, %v349, 0.0
    %v430 = vsel %vm354, %v429, 0.0
    %431 = vadd.xlane.f32.xlu0 %v430
    %v432 = vpop.xlane.xlu0 %431
    %v433 = vrot.slane %v432, 4
    %v434 = vadd.f32 %v432, %v433
    %v435 = vrot.slane %v434, 2
    %v436 = vadd.f32 %v434, %v435
    %v437 = vrot.slane %v436, 1
    %v438 = vadd.f32 %v436, %v437
    %s439 = vtos %v438
    %s440 = scvt.f32.s32.to.zero.pseudo %s439
    %s441 = scalar_lea.smem [#allocation2], 5
    %442 = sst [smem:[%s441]] %s440
    %vm443 = vcmp.eq.s32.totalorder %v351, 6
    %v444 = vsel %vm443, %v349, 0.0
    %v445 = vsel %vm354, %v444, 0.0
    %446 = vadd.xlane.f32.xlu0 %v445
    %v447 = vpop.xlane.xlu0 %446
    %v448 = vrot.slane %v447, 4
    %v449 = vadd.f32 %v447, %v448
    %v450 = vrot.slane %v449, 2
    %v451 = vadd.f32 %v449, %v450
    %v452 = vrot.slane %v451, 1
    %v453 = vadd.f32 %v451, %v452
    %s454 = vtos %v453
    %s455 = scvt.f32.s32.to.zero.pseudo %s454
    %s456 = scalar_lea.smem [#allocation2], 6
    %457 = sst [smem:[%s456]] %s455
    %vm458 = vcmp.eq.s32.totalorder %v351, 7
    %v459 = vsel %vm458, %v349, 0.0
    %v460 = vsel %vm354, %v459, 0.0
    %461 = vadd.xlane.f32.xlu0 %v460
    %v462 = vpop.xlane.xlu0 %461
    %v463 = vrot.slane %v462, 4
    %v464 = vadd.f32 %v462, %v463
    %v465 = vrot.slane %v464, 2
    %v466 = vadd.f32 %v464, %v465
    %v467 = vrot.slane %v466, 1
    %v468 = vadd.f32 %v466, %v467
    %s469 = vtos %v468
    %s470 = scvt.f32.s32.to.zero.pseudo %s469
    %s471 = scalar_lea.smem [#allocation2], 7
    %472 = sst [smem:[%s471]] %s470
    %vm473 = vcmp.lt.s32.totalorder %v351, 2
    %v474 = vsel %vm473, 1, 0
    %v475 = vcvt.s32.f32 %v474
    %v476 = vsub.f32 %v347, %v238
    %v477 = vmul.f32 %v476, %v475
    %v478 = vmul.f32 %v477, %v477
    %v479 = vsel %vm216, %v478, 0.0
    %480 = vadd.xlane.f32.xlu0 %v479
    %v481 = vpop.xlane.xlu0 %480
    %v482 = vrot.slane %v481, 4
    %v483 = vadd.f32 %v481, %v482
    %v484 = vrot.slane %v483, 2
    %v485 = vadd.f32 %v483, %v484
    %v486 = vrot.slane %v485, 1
    %v487 = vadd.f32 %v485, %v486
    %s488 = vtos %v487
    %s489 = smul.f32 %s488, 1.25
    %v490 = vrcp.pop 64.0
    %v491 = vmul.f32 64.0, %v490
    %v492 = vsub.f32 1.0, %v491
    %v493 = vmul.f32 %v490, %v492
    %v494 = vadd.f32 %v490, %v493
    %vm495 = vweird.f32 %v490
    %v496 = vsel %vm495, %v490, %v494
    %s497 = vtos %v496
    %s498 = smul.f32 %s489, %s497
    %s499 = scalar_lea.smem [#allocation5], 0
    %500 = sst [smem:[%s499]] %s498
    %v501 = vld [vmem:[%s7] sm:$0xff]
    %v502 = vld [vmem:[%s7 + $0x8] sm:$0xff]
    %v503 = vld [vmem:[%s7 + $0x10] sm:$0xff]
    %v504 = vld [vmem:[%s7 + $0x18] sm:$0xff]
    %v505 = vld [vmem:[%s8] sm:$0x1]
    %v507 = vperm.slane %v505, 0
    %v510 = vsel %vm216, %v347, 0
    %512 = vmatpush.msra.mxu0 0.0
    %513 = vmatpush.msra.mxu0 0.0
    %514 = vmatpush.msra.mxu0 0.0
    %515 = vmatpush.msra.mxu0 0.0
    %516 = vmatpush.msra.mxu0 0.0
    %517 = vmatpush.msra.mxu0 0.0
    %518 = vmatpush.msra.mxu0 0.0
    %519 = vmatpush.msra.mxu0 0.0
    %520 = vmatpush.msra.mxu0 0.0
    %521 = vmatpush.msra.mxu0 0.0
    %522 = vmatpush.msra.mxu0 0.0
    %523 = vmatpush.msra.mxu0 0.0
    %524 = vmatpush.msra.mxu0 %v504
    %525 = vmatpush.msra.mxu0 %v503
    %526 = vmatpush.msra.mxu0 %v502
    %527 = vmatpush.msra.mxu0 %v501
    %528 = vmatmul.f32.gmra.mxu0 %v510
    %v529 = vpop.f32.mrf.mxu0
    %v530 = vadd.f32 %v507, %v529
    %531 = vdwg.mxu0
    %v532 = vmax.f32 %v530, 0.0
    %v533 = vpack.c.bf16 %v532, %v532
    %v534 = vld [vmem:[%s9] sm:$0xff]
    %v535 = vld [vmem:[%s9 + $0x8] sm:$0xff]
    %v536 = vld [vmem:[%s9 + $0x10] sm:$0xff]
    %v537 = vld [vmem:[%s9 + $0x18] sm:$0xff]
    %v538 = vld [vmem:[%s10] sm:$0x3]
    %v540 = vperm.slane %v538, 0
    %v541 = vperm.slane %v538, 1
    %v548 = vunpack.c.l.b16 %v534
    %v549 = vunpack.c.h.b16 %v534
    %v550 = vunpack.c.l.b16 %v535
    %v551 = vunpack.c.h.b16 %v535
    %v552 = vunpack.c.l.b16 %v536
    %v553 = vunpack.c.h.b16 %v536
    %v554 = vunpack.c.l.b16 %v537
    %v555 = vunpack.c.h.b16 %v537
    %v556 = vpack.c.b16 %v550, %v548
    %v557 = vpack.c.b16 %v551, %v549
    %v558 = vpack.c.b16 %v554, %v552
    %v559 = vpack.c.b16 %v555, %v553
    %v565 = vsel %vm216, %v533, 0
    %567 = vmatpush.bf16.msra.mxu0 0
    %568 = vmatpush.bf16.msra.mxu0 0
    %569 = vmatpush.bf16.msra.mxu0 0
    %570 = vmatpush.bf16.msra.mxu0 0
    %571 = vmatpush.bf16.msra.mxu0 0
    %572 = vmatpush.bf16.msra.mxu0 0
    %573 = vmatpush.bf16.msra.mxu0 %v558
    %574 = vmatpush.bf16.msra.mxu0 %v556
    %575 = vmatmul.bf16.gmra.mxu0 %v565
    %v576 = vpop.f32.mrf.mxu0
    %v577 = vadd.f32 %v540, %v576
    %v578 = vpop.f32.mrf.mxu0
    %579 = vdwg.mxu0
    %580 = vmatpush.bf16.msra.mxu0 0
    %581 = vmatpush.bf16.msra.mxu0 0
    %582 = vmatpush.bf16.msra.mxu0 0
    %583 = vmatpush.bf16.msra.mxu0 0
    %584 = vmatpush.bf16.msra.mxu0 0
    %585 = vmatpush.bf16.msra.mxu0 0
    %586 = vmatpush.bf16.msra.mxu0 %v559
    %587 = vmatpush.bf16.msra.mxu0 %v557
    %588 = vmatmul.bf16.gmra.mxu0 %v565
    %v589 = vpop.f32.mrf.mxu0
    %v590 = vadd.f32 %v541, %v589
    %v591 = vpop.f32.mrf.mxu0
    %592 = vdwg.mxu0
    %593 = vst [vmem:[%s11] sm:$0xff] %v577
    %594 = vst [vmem:[%s11 + $0x8] sm:$0xff] %v590
    %v595 = vsub.f32 %v577, %v46
    %v596 = vsub.f32 %v590, %v47
    %v597 = vmul.f32 %v595, %v475
    %v598 = vmul.f32 %v596, %v475
    %v599 = vmul.f32 %v597, %v597
    %v600 = vmul.f32 %v598, %v598
    %v601 = vadd.f32 %v599, %v600
    %602 = vadd.xlane.f32.xlu0 %v601
    %v603 = vpop.xlane.xlu0 %602
    %v604 = vrot.slane %v603, 4
    %v605 = vadd.f32 %v603, %v604
    %v606 = vrot.slane %v605, 2
    %v607 = vadd.f32 %v605, %v606
    %v608 = vrot.slane %v607, 1
    %v609 = vadd.f32 %v607, %v608
    %s610 = vtos %v609
    %v611 = vrcp.pop 512.0
    %v612 = vmul.f32 512.0, %v611
    %v613 = vsub.f32 1.0, %v612
    %v614 = vmul.f32 %v611, %v613
    %v615 = vadd.f32 %v611, %v614
    %vm616 = vweird.f32 %v611
    %v617 = vsel %vm616, %v611, %v615
    %s618 = vtos %v617
    %s619 = smul.f32 %s610, %s618
    %s620 = scalar_lea.smem [#allocation6], 0
    %621 = sst [smem:[%s620]] %s619
    // Predicated region
    $region46: #{encoder_vqvae_forward.1} parent=1 // pred_check
      _
    $region47: #{encoder_vqvae_forward.1} parent=1 // pred_check_branch
      %623 = sbr.rel (0) target = $region49
    $region48: #{encoder_vqvae_forward.1} parent=1 // pred_region
      _
    $region49: #{encoder_vqvae_forward.1} parent=1 // pred_fallthru
      _
    // Predicated region
    $region50: #{encoder_vqvae_forward.1} parent=1 // pred_check
      _
    $region51: #{encoder_vqvae_forward.1} parent=1 // pred_check_branch
      %625 = sbr.rel (0) target = $region53
    $region52: #{encoder_vqvae_forward.1} parent=1 // pred_region
      %627 = vsyncadd [#allocation4], 0
      %s629 = sshll.u32 %s12, 4
      %s630 = int_to_ptr.vmem [resolvable:$true] %s629
      %632 = dma.smem_to_vmem [#allocation2], 16, %s630, [#allocation4]
    $region53: #{encoder_vqvae_forward.1} parent=1 // pred_fallthru
      _
    // Predicated region
    $region54: #{encoder_vqvae_forward.1} parent=1 // pred_check
      _
    $region55: #{encoder_vqvae_forward.1} parent=1 // pred_check_branch
      %634 = sbr.rel (0) target = $region57
    $region56: #{encoder_vqvae_forward.1} parent=1 // pred_region
      %636 = vsyncadd [#allocation3], 0
      %s638 = sshll.u32 %s13, 4
      %s639 = int_to_ptr.hbm [resolvable:$true] %s638
      %641 = dma.smem_to_hbm [#allocation5], 16, %s639, [#allocation3]
    $region57: #{encoder_vqvae_forward.1} parent=1 // pred_fallthru
      _
    // Predicated region
    $region58: #{encoder_vqvae_forward.1} parent=1 // pred_check
      _
    $region59: #{encoder_vqvae_forward.1} parent=1 // pred_check_branch
      %643 = sbr.rel (0) target = $region61
    $region60: #{encoder_vqvae_forward.1} parent=1 // pred_region
      %645 = vsyncadd [#allocation7], 0
      %s647 = sshll.u32 %s14, 4
      %s648 = int_to_ptr.hbm [resolvable:$true] %s647
      %650 = dma.smem_to_hbm [#allocation6], 16, %s648, [#allocation7]
    $region61: #{encoder_vqvae_forward.1} parent=1 // pred_fallthru
      _
    // Predicated region
    $region62: #{encoder_vqvae_forward.1} parent=1 // pred_check
      _
    $region63: #{encoder_vqvae_forward.1} parent=1 // pred_check_branch
      %652 = sbr.rel (0) target = $region65
    $region64: #{encoder_vqvae_forward.1} parent=1 // pred_region
      _
    $region65: #{encoder_vqvae_forward.1} parent=1 // pred_fallthru
      _
    // Predicated region
    $region66: #{encoder_vqvae_forward.1} parent=1 // pred_check
      _
    $region67: #{encoder_vqvae_forward.1} parent=1 // pred_check_branch
      %654 = sbr.rel (0) target = $region69
    $region68: #{encoder_vqvae_forward.1} parent=1 // pred_region
      %656 = dma.done [#allocation4], 16
    $region69: #{encoder_vqvae_forward.1} parent=1 // pred_fallthru
      _
    // Predicated region
    $region70: #{encoder_vqvae_forward.1} parent=1 // pred_check
      _
    $region71: #{encoder_vqvae_forward.1} parent=1 // pred_check_branch
      %658 = sbr.rel (0) target = $region73
    $region72: #{encoder_vqvae_forward.1} parent=1 // pred_region
      %660 = dma.done [#allocation3], 16
    $region73: #{encoder_vqvae_forward.1} parent=1 // pred_fallthru
      _
    // Predicated region
    $region74: #{encoder_vqvae_forward.1} parent=1 // pred_check
      _
    $region75: #{encoder_vqvae_forward.1} parent=1 // pred_check_branch
      %662 = sbr.rel (0) target = $region77
    $region76: #{encoder_vqvae_forward.1} parent=1 // pred_region
      %664 = dma.done [#allocation7], 16
    $region77: #{encoder_vqvae_forward.1} parent=1 // pred_fallthru
      _
    %665 = sfence
    %666 = vsyncpa [#allocation3], 1
    %667 = vsyncpa [#allocation7], 1
    %668 = vsyncpa [#allocation4], 1

</llo_original>
